<compile_context>
chip_gen: v7x
topology: tpu7x:2x2x1
jax: 0.10.0
libtpu: 0.0.40
codegen_flags: <defaults>
</compile_context>

<pallas_src>
import jax
import jax.numpy as jnp
from jax.experimental import pallas as pl
from jax.experimental.pallas import tpu as pltpu


def hjb_ode_kernel(reg_ref, x_ref, theta_ref, w_cat_ref, w_v_ref, b_v_ref,
                   dloss_ref, dtheta_ref):
    x = x_ref[...]                       # [N, D]
    theta = theta_ref[...]               # [1, P]

    # dtheta_dt = v_nn(cur_theta): linear + tanh
    dtheta = jnp.tanh(
        jnp.dot(theta, w_v_ref[...], preferred_element_type=jnp.float32)
        + b_v_ref[...])                                                    # [1, P]

    # Fused feature/operator matmul + single tanh stream.
    #   act[:, :P]  = du_dtheta(x, theta)   (theta_gradient)
    #   act[:, P:]  = tanh(x @ W_op)        (operator features)
    act = jnp.tanh(
        jnp.dot(x, w_cat_ref[...], preferred_element_type=jnp.float32))    # [N, 2P]

    # projection - operator_out == sum_j act * concat([dtheta, -theta])
    coeff = jnp.concatenate([dtheta, -theta], axis=1)                      # [1, 2P]
    diff_row = jnp.sum(act * coeff, axis=1, keepdims=True)                 # [N, 1]

    n = diff_row.shape[0]
    mean_diff = jnp.sum(diff_row * diff_row, axis=0, keepdims=True) / n    # [1, 1]
    reg_sum = jnp.sum(dtheta * dtheta, axis=1, keepdims=True)              # [1, 1]

    dloss_ref[...] = mean_diff + reg_ref[0, 0] * reg_sum                   # [1, 1]
    dtheta_ref[...] = dtheta                                               # [1, P]


def hjb_ode_forward(t, y, x, params, regularization=0.0):
    """Pallas implementation of HJB_ODE.forward(t, y) -> (dloss, dtheta_dt)."""
    del t
    _cur_loss, cur_theta = y
    w_feat, w_op, w_v, b_v = params
    P = cur_theta.shape[1]

    # Fuse the two D x P weights into one [D, 2P] slab (cheap; ideally hoisted
    # once per ODE solve if weights are static across steps).
    w_cat = jnp.concatenate([w_feat, w_op], axis=1)
    reg = jnp.asarray(regularization, jnp.float32).reshape(1, 1)

    vmem = pl.BlockSpec(memory_space=pltpu.MemorySpace.VMEM)
    smem = pl.BlockSpec(memory_space=pltpu.MemorySpace.SMEM)

    dloss, dtheta_dt = pl.pallas_call(
        hjb_ode_kernel,
        out_shape=(jax.ShapeDtypeStruct((1, 1), jnp.float32),
                   jax.ShapeDtypeStruct((1, P), jnp.float32)),
        in_specs=[smem, vmem, vmem, vmem, vmem, vmem],
        out_specs=(vmem, vmem),
    )(reg, x, cur_theta, w_cat, w_v, b_v)

    return dloss[0, 0], dtheta_dt


def hjb_ode_ref(t, y, x, params, regularization=0.0):
    """Pure-JAX reference mirroring the PyTorch module."""
    del t
    _cur_loss, theta = y
    w_feat, w_op, w_v, b_v = params
    dtheta = jnp.tanh(theta @ w_v + b_v)
    theta_gradient = jnp.tanh(x @ w_feat)
    operator_out = jnp.sum(jnp.tanh(x @ w_op) * theta, axis=1, keepdims=True)
    projection = jnp.sum(theta_gradient * dtheta, axis=1, keepdims=True)
    diff = jnp.sum((projection - operator_out) ** 2, axis=1)
    dloss = jnp.mean(diff + regularization * jnp.sum(dtheta ** 2, axis=1))
    return dloss, dtheta


if __name__ == "__main__":
    N, D, P = 128, 8, 128          # spatial points, spatial dim, #parameters
    key = jax.random.PRNGKey(0)
    ks = jax.random.split(key, 6)

    x = jax.random.normal(ks[0], (N, D), jnp.float32)                 # self.x
    theta = 0.1 * jax.random.normal(ks[1], (1, P), jnp.float32)       # cur_theta
    w_feat = jax.random.normal(ks[2], (D, P), jnp.float32) / jnp.sqrt(float(D))
    w_op = jax.random.normal(ks[3], (D, P), jnp.float32) / jnp.sqrt(float(D))
    w_v = jax.random.normal(ks[4], (P, P), jnp.float32) / jnp.sqrt(float(P))
    b_v = 0.01 * jax.random.normal(ks[5], (1, P), jnp.float32)
    params = (w_feat, w_op, w_v, b_v)

    reg = 0.1
    t = jnp.float32(0.0)
    y = (jnp.float32(0.0), theta)    # (cur_loss, cur_theta); cur_loss unused

    dloss, dtheta_dt = hjb_ode_forward(t, y, x, params, reg)
    jax.block_until_ready((dloss, dtheta_dt))

    ref_loss, ref_dtheta = hjb_ode_ref(t, y, x, params, reg)
    assert jnp.allclose(dloss, ref_loss, rtol=2e-3, atol=2e-3)
    assert jnp.allclose(dtheta_dt, ref_dtheta, rtol=2e-3, atol=2e-3)

    print("KERNEL_OK")
</pallas_src>

<mosaic_0001>
module attributes {stable_mosaic.version = 11 : i64} {
  func.func @hjb_ode_kernel(%arg0: memref<1x1xf32, #tpu.memory_space<smem>>, %arg1: memref<128x8xf32, #tpu.memory_space<vmem>>, %arg2: memref<1x128xf32, #tpu.memory_space<vmem>>, %arg3: memref<8x256xf32, #tpu.memory_space<vmem>>, %arg4: memref<128x128xf32, #tpu.memory_space<vmem>>, %arg5: memref<1x128xf32, #tpu.memory_space<vmem>>, %arg6: memref<1x1xf32, #tpu.memory_space<vmem>>, %arg7: memref<1x128xf32, #tpu.memory_space<vmem>>) attributes {dimension_semantics = [], scalar_prefetch = 0 : i64, scratch_operands = 0 : i64, tpu.core_type = #tpu.core_type<tc>} {
    %c0 = arith.constant 0 : index
    %c0_0 = arith.constant 0 : index
    %0 = vector.load %arg1[%c0, %c0_0] : memref<128x8xf32, #tpu.memory_space<vmem>>, vector<128x8xf32>
    %c0_1 = arith.constant 0 : index
    %c0_2 = arith.constant 0 : index
    %1 = vector.load %arg2[%c0_1, %c0_2] : memref<1x128xf32, #tpu.memory_space<vmem>>, vector<1x128xf32>
    %c0_3 = arith.constant 0 : index
    %c0_4 = arith.constant 0 : index
    %2 = vector.load %arg4[%c0_3, %c0_4] : memref<128x128xf32, #tpu.memory_space<vmem>>, vector<128x128xf32>
    %cst = arith.constant dense<0.000000e+00> : vector<1x128xf32>
    %3 = tpu.matmul %1, %2, %cst {dimension_numbers = #tpu.dot_dimension_numbers<[1], [0], [0], [1], [0, 0, 1, 1], [], []>} : vector<1x128xf32>, vector<128x128xf32>, vector<1x128xf32> -> vector<1x128xf32>
    %c0_5 = arith.constant 0 : index
    %c0_6 = arith.constant 0 : index
    %4 = vector.load %arg5[%c0_5, %c0_6] : memref<1x128xf32, #tpu.memory_space<vmem>>, vector<1x128xf32>
    %5 = arith.addf %3, %4 : vector<1x128xf32>
    %6 = math.tanh %5 : vector<1x128xf32>
    %c0_7 = arith.constant 0 : index
    %c0_8 = arith.constant 0 : index
    %7 = vector.load %arg3[%c0_7, %c0_8] : memref<8x256xf32, #tpu.memory_space<vmem>>, vector<8x256xf32>
    %cst_9 = arith.constant dense<0.000000e+00> : vector<128x256xf32>
    %8 = tpu.matmul %0, %7, %cst_9 {dimension_numbers = #tpu.dot_dimension_numbers<[1], [0], [0], [1], [0, 0, 1, 1], [], []>} : vector<128x8xf32>, vector<8x256xf32>, vector<128x256xf32> -> vector<128x256xf32>
    %9 = math.tanh %8 : vector<128x256xf32>
    %cst_10 = arith.constant 0.000000e+00 : f32
    %10 = vector.broadcast %cst_10 : f32 to vector<1x128xf32>
    %11 = arith.subf %10, %1 : vector<1x128xf32>
    %12 = tpu.concatenate %6, %11 in 1 : vector<1x128xf32>, vector<1x128xf32> -> vector<1x256xf32>
    %13 = vector.broadcast %12 : vector<1x256xf32> to vector<128x256xf32>
    %14 = arith.mulf %9, %13 : vector<128x256xf32>
    %cst_11 = arith.constant dense<0.000000e+00> : vector<128xf32>
    %15 = vector.multi_reduction <add>, %14, %cst_11 [1] : vector<128x256xf32> to vector<128xf32>
    %16 = vector.shape_cast %15 : vector<128xf32> to vector<128x1xf32>
    %17 = arith.mulf %16, %16 : vector<128x1xf32>
    %cst_12 = arith.constant dense<0.000000e+00> : vector<1xf32>
    %18 = vector.multi_reduction <add>, %17, %cst_12 [0] : vector<128x1xf32> to vector<1xf32>
    %19 = vector.shape_cast %18 : vector<1xf32> to vector<1x1xf32>
    %cst_13 = arith.constant 1.280000e+02 : f32
    %20 = vector.broadcast %cst_13 : f32 to vector<1x1xf32>
    %21 = arith.divf %19, %20 : vector<1x1xf32>
    %22 = arith.mulf %6, %6 : vector<1x128xf32>
    %cst_14 = arith.constant dense<0.000000e+00> : vector<1xf32>
    %23 = vector.multi_reduction <add>, %22, %cst_14 [1] : vector<1x128xf32> to vector<1xf32>
    %24 = vector.shape_cast %23 : vector<1xf32> to vector<1x1xf32>
    %c0_15 = arith.constant 0 : index
    %c0_16 = arith.constant 0 : index
    %25 = memref.load %arg0[%c0_15, %c0_16] : memref<1x1xf32, #tpu.memory_space<smem>>
    %26 = vector.broadcast %25 : f32 to vector<1x1xf32>
    %27 = arith.mulf %26, %24 : vector<1x1xf32>
    %28 = arith.addf %21, %27 : vector<1x1xf32>
    %c0_17 = arith.constant 0 : index
    %c0_18 = arith.constant 0 : index
    %29 = vector.load %arg6[%c0_17, %c0_18] : memref<1x1xf32, #tpu.memory_space<vmem>>, vector<1x1xf32>
    tpu.vector_store %arg6[%c0_17, %c0_18], %28 {strides = array<i32>} : memref<1x1xf32, #tpu.memory_space<vmem>>, vector<1x1xf32>,
    %c0_19 = arith.constant 0 : index
    %c0_20 = arith.constant 0 : index
    %30 = vector.load %arg7[%c0_19, %c0_20] : memref<1x128xf32, #tpu.memory_space<vmem>>, vector<1x128xf32>
    tpu.vector_store %arg7[%c0_19, %c0_20], %6 {strides = array<i32>} : memref<1x128xf32, #tpu.memory_space<vmem>>, vector<1x128xf32>,
    return
  }
}

</mosaic_0001>

<llo_original>
// kernel: tpu_custom_call.1
$region0: #{tpu_custom_call.1}
  #allocation0 [shape = 'u32[]', space=smem, size = 0x4, offset = 0x4, fixed_abs, tag = 'smem constant byte address 0x4 - core index']
  #allocation1 [shape = 'u32[144,128]{1,0:T(1,128)}', space=vmem, size = 0x12000, scoped, tag = 'internal scratch']
  #allocation2 [shape = 'f32[1,1]{1,0:T(1,128)S(6)}', space=smem, size = 0x200, scoped, tag = 'scoped memory for tpu_custom_call.1']
  %s0 = inlined_call_operand.<no memory space> [shape: f32[1,1], index: 0, kind: input, shape index: {}]
  %s1 = inlined_call_operand.vmem [shape: f32[128,8], index: 1, kind: input, shape index: {}]
  %s2 = inlined_call_operand.vmem [shape: f32[1,128], index: 2, kind: input, shape index: {}]
  %s3 = inlined_call_operand.vmem [shape: f32[8,256], index: 3, kind: input, shape index: {}]
  %s4 = inlined_call_operand.vmem [shape: f32[128,128], index: 4, kind: input, shape index: {}]
  %s5 = inlined_call_operand.vmem [shape: f32[1,128], index: 5, kind: input, shape index: {}]
  %s6 = inlined_call_operand.hbm [shape: f32[1,1], index: 6, kind: output, shape index: {0}]
  %s7 = inlined_call_operand.hbm [shape: f32[1,128], index: 7, kind: output, shape index: {1}]
  %8 = xla_tuple %s6, %s7
  %s9 = sld [smem:[#allocation0]]
  $region42: #{tpu_custom_call.1} parent=0
    _
  %s11 = ssub.s32 1, %s9
  %s12 = scalar_select 0, %s11, %s9
  %13 = sst [smem:[#allocation2]] %s0
  $region1: #{tpu_custom_call.1} parent=0
    #allocation3 [shape = 'u8[512]{0}', space=vmem, size = 0x400, scoped, tag = 'output window, operand 0, single buffered']
    #allocation4 [shape = 's32[1]{0}', space=sflag, size = 0x4, scoped, tag = 'scoped memory for tpu_custom_call.1']
    #allocation5 [shape = 'u8[512]{0}', space=vmem, size = 0x400, scoped, tag = 'output window, operand 1, single buffered']
    #allocation6 [shape = 's32[1]{0}', space=sflag, size = 0x4, scoped, tag = 'scoped memory for tpu_custom_call.1']
    %14 = vsyncpa [#allocation4], 0
    %15 = vsyncpa [#allocation6], 0
    // Predicated region
    $region2: #{tpu_custom_call.1} parent=1 // pred_check
      _
    $region3: #{tpu_custom_call.1} parent=1 // pred_check_branch
      %17 = sbr.rel (0) target = $region5
    $region4: #{tpu_custom_call.1} parent=1 // pred_region
      _
    $region5: #{tpu_custom_call.1} parent=1 // pred_fallthru
      _
    // Predicated region
    $region6: #{tpu_custom_call.1} parent=1 // pred_check
      _
    $region7: #{tpu_custom_call.1} parent=1 // pred_check_branch
      %19 = sbr.rel (0) target = $region9
    $region8: #{tpu_custom_call.1} parent=1 // pred_region
      _
    $region9: #{tpu_custom_call.1} parent=1 // pred_fallthru
      _
    // Predicated region
    $region10: #{tpu_custom_call.1} parent=1 // pred_check
      _
    $region11: #{tpu_custom_call.1} parent=1 // pred_check_branch
      %21 = sbr.rel (0) target = $region13
    $region12: #{tpu_custom_call.1} parent=1 // pred_region
      _
    $region13: #{tpu_custom_call.1} parent=1 // pred_fallthru
      _
    // Predicated region
    $region14: #{tpu_custom_call.1} parent=1 // pred_check
      _
    $region15: #{tpu_custom_call.1} parent=1 // pred_check_branch
      %23 = sbr.rel (0) target = $region17
    $region16: #{tpu_custom_call.1} parent=1 // pred_region
      _
    $region17: #{tpu_custom_call.1} parent=1 // pred_fallthru
      _
    // Predicated region
    $region18: #{tpu_custom_call.1} parent=1 // pred_check
      _
    $region19: #{tpu_custom_call.1} parent=1 // pred_check_branch
      %25 = sbr.rel (0) target = $region21
    $region20: #{tpu_custom_call.1} parent=1 // pred_region
      _
    $region21: #{tpu_custom_call.1} parent=1 // pred_fallthru
      _
    // Predicated region
    $region22: #{tpu_custom_call.1} parent=1 // pred_check
      _
    $region23: #{tpu_custom_call.1} parent=1 // pred_check_branch
      %27 = sbr.rel (0) target = $region25
    $region24: #{tpu_custom_call.1} parent=1 // pred_region
      _
    $region25: #{tpu_custom_call.1} parent=1 // pred_fallthru
      _
    %v28 = vld [vmem:[%s1] sm:$0xff]
    %v29 = vld [vmem:[%s1 + $0x8] sm:$0xff]
    %v30 = vld [vmem:[%s1 + $0x10] sm:$0xff]
    %v31 = vld [vmem:[%s1 + $0x18] sm:$0xff]
    %v32 = vld [vmem:[%s1 + $0x20] sm:$0xff]
    %v33 = vld [vmem:[%s1 + $0x28] sm:$0xff]
    %v34 = vld [vmem:[%s1 + $0x30] sm:$0xff]
    %v35 = vld [vmem:[%s1 + $0x38] sm:$0xff]
    %v36 = vld [vmem:[%s1 + $0x40] sm:$0xff]
    %v37 = vld [vmem:[%s1 + $0x48] sm:$0xff]
    %v38 = vld [vmem:[%s1 + $0x50] sm:$0xff]
    %v39 = vld [vmem:[%s1 + $0x58] sm:$0xff]
    %v40 = vld [vmem:[%s1 + $0x60] sm:$0xff]
    %v41 = vld [vmem:[%s1 + $0x68] sm:$0xff]
    %v42 = vld [vmem:[%s1 + $0x70] sm:$0xff]
    %v43 = vld [vmem:[%s1 + $0x78] sm:$0xff]
    %v44 = vld [vmem:[%s2] sm:$0x1]
    %v45 = vld [vmem:[%s4] sm:$0xff]
    %v46 = vld [vmem:[%s4 + $0x8] sm:$0xff]
    %v47 = vld [vmem:[%s4 + $0x10] sm:$0xff]
    %v48 = vld [vmem:[%s4 + $0x18] sm:$0xff]
    %v49 = vld [vmem:[%s4 + $0x20] sm:$0xff]
    %v50 = vld [vmem:[%s4 + $0x28] sm:$0xff]
    %v51 = vld [vmem:[%s4 + $0x30] sm:$0xff]
    %v52 = vld [vmem:[%s4 + $0x38] sm:$0xff]
    %v53 = vld [vmem:[%s4 + $0x40] sm:$0xff]
    %v54 = vld [vmem:[%s4 + $0x48] sm:$0xff]
    %v55 = vld [vmem:[%s4 + $0x50] sm:$0xff]
    %v56 = vld [vmem:[%s4 + $0x58] sm:$0xff]
    %v57 = vld [vmem:[%s4 + $0x60] sm:$0xff]
    %v58 = vld [vmem:[%s4 + $0x68] sm:$0xff]
    %v59 = vld [vmem:[%s4 + $0x70] sm:$0xff]
    %v60 = vld [vmem:[%s4 + $0x78] sm:$0xff]
    %v61 = vld [vmem:[%s5] sm:$0x1]
    %62 = vmatprep.subr.mxu0 0.0
    %63 = vmatpush1.msra.mxu0 %v45
    %64 = vmatprep.subr.mxu0 0.0
    %65 = vmatpush1.msra.mxu0 %v46
    %66 = vmatprep.subr.mxu0 0.0
    %67 = vmatpush1.msra.mxu0 %v47
    %68 = vmatprep.subr.mxu0 0.0
    %69 = vmatpush1.msra.mxu0 %v48
    %70 = vmatprep.subr.mxu0 0.0
    %71 = vmatpush1.msra.mxu0 %v49
    %72 = vmatprep.subr.mxu0 0.0
    %73 = vmatpush1.msra.mxu0 %v50
    %74 = vmatprep.subr.mxu0 0.0
    %75 = vmatpush1.msra.mxu0 %v51
    %76 = vmatprep.subr.mxu0 0.0
    %77 = vmatpush1.msra.mxu0 %v52
    %78 = vmatprep.subr.mxu0 0.0
    %79 = vmatpush1.msra.mxu0 %v53
    %80 = vmatprep.subr.mxu0 0.0
    %81 = vmatpush1.msra.mxu0 %v54
    %82 = vmatprep.subr.mxu0 0.0
    %83 = vmatpush1.msra.mxu0 %v55
    %84 = vmatprep.subr.mxu0 0.0
    %85 = vmatpush1.msra.mxu0 %v56
    %86 = vmatprep.subr.mxu0 0.0
    %87 = vmatpush1.msra.mxu0 %v57
    %88 = vmatprep.subr.mxu0 0.0
    %89 = vmatpush1.msra.mxu0 %v58
    %90 = vmatprep.subr.mxu0 0.0
    %91 = vmatpush1.msra.mxu0 %v59
    %92 = vmatprep.subr.mxu0 0.0
    %93 = vmatpush1.msra.mxu0 %v60
    %94 = vmatprep.subr.mxu0 0.0
    %95 = vmatpush1.msra.mxu0 0.0
    %96 = vmatprep.subr.mxu0 0.0
    %97 = vmatpush1.msra.mxu0 0.0
    %98 = vmatprep.subr.mxu0 0.0
    %99 = vmatpush1.msra.mxu0 0.0
    %100 = vmatprep.subr.mxu0 0.0
    %101 = vmatpush1.msra.mxu0 0.0
    %102 = vmatprep.subr.mxu0 0.0
    %103 = vmatpush1.msra.mxu0 0.0
    %104 = vmatprep.subr.mxu0 0.0
    %105 = vmatpush1.msra.mxu0 0.0
    %106 = vmatprep.subr.mxu0 0.0
    %107 = vmatpush1.msra.mxu0 0.0
    %108 = vmatprep.subr.mxu0 0.0
    %109 = vmatpush1.msra.mxu0 0.0
    %110 = vmatprep.subr.mxu0 0.0
    %111 = vmatpush1.msra.mxu0 0.0
    %112 = vmatprep.subr.mxu0 0.0
    %113 = vmatpush1.msra.mxu0 0.0
    %114 = vmatprep.subr.mxu0 0.0
    %115 = vmatpush1.msra.mxu0 0.0
    %116 = vmatprep.subr.mxu0 0.0
    %117 = vmatpush1.msra.mxu0 0.0
    %118 = vmatprep.subr.mxu0 0.0
    %119 = vmatpush1.msra.mxu0 0.0
    %120 = vmatprep.subr.mxu0 0.0
    %121 = vmatpush1.msra.mxu0 0.0
    %122 = vmatprep.subr.mxu0 0.0
    %123 = vmatpush1.msra.mxu0 0.0
    %124 = vmatprep.subr.mxu0 0.0
    %125 = vmatpush1.msra.mxu0 0.0
    %126 = vmatprep.mubr.f32.mxu0 0.0
    %127 = vmatmul.mubr.f32.gmra.mrb[0].mxu0 %v44
    %v128 = vpop.f32.mrb[0].mxu0
    %v129 = vadd.f32 %v61, %v128
    %v130 = vpop.f32.mrb[0].mxu0
    %131 = vdwg.mxu0
    %v132 = vtanh.pop %v129
    %v133 = vld [vmem:[%s3] sm:$0xff]
    %v134 = vld [vmem:[%s3 + $0x8] sm:$0xff]
    %vm135 = vcmask 64512
    %v137 = vsel %vm135, %v28, 0
    %v140 = vsel %vm135, %v29, 0
    %v143 = vsel %vm135, %v30, 0
    %v146 = vsel %vm135, %v31, 0
    %v149 = vsel %vm135, %v32, 0
    %v152 = vsel %vm135, %v33, 0
    %v155 = vsel %vm135, %v34, 0
    %v158 = vsel %vm135, %v35, 0
    %v161 = vsel %vm135, %v36, 0
    %v164 = vsel %vm135, %v37, 0
    %v167 = vsel %vm135, %v38, 0
    %v170 = vsel %vm135, %v39, 0
    %v173 = vsel %vm135, %v40, 0
    %v176 = vsel %vm135, %v41, 0
    %v179 = vsel %vm135, %v42, 0
    %v182 = vsel %vm135, %v43, 0
    %184 = vmatprep.subr.mxu0 %v134
    %185 = vmatpush1.msra.mxu0 %v133
    %186 = vmatprep.subr.mxu0 0.0
    %187 = vmatpush1.msra.mxu0 0.0
    %188 = vmatprep.subr.mxu0 0.0
    %189 = vmatpush1.msra.mxu0 0.0
    %190 = vmatprep.subr.mxu0 0.0
    %191 = vmatpush1.msra.mxu0 0.0
    %192 = vmatprep.subr.mxu0 0.0
    %193 = vmatpush1.msra.mxu0 0.0
    %194 = vmatprep.subr.mxu0 0.0
    %195 = vmatpush1.msra.mxu0 0.0
    %196 = vmatprep.subr.mxu0 0.0
    %197 = vmatpush1.msra.mxu0 0.0
    %198 = vmatprep.subr.mxu0 0.0
    %199 = vmatpush1.msra.mxu0 0.0
    %200 = vmatprep.subr.mxu0 0.0
    %201 = vmatpush1.msra.mxu0 0.0
    %202 = vmatprep.subr.mxu0 0.0
    %203 = vmatpush1.msra.mxu0 0.0
    %204 = vmatprep.subr.mxu0 0.0
    %205 = vmatpush1.msra.mxu0 0.0
    %206 = vmatprep.subr.mxu0 0.0
    %207 = vmatpush1.msra.mxu0 0.0
    %208 = vmatprep.subr.mxu0 0.0
    %209 = vmatpush1.msra.mxu0 0.0
    %210 = vmatprep.subr.mxu0 0.0
    %211 = vmatpush1.msra.mxu0 0.0
    %212 = vmatprep.subr.mxu0 0.0
    %213 = vmatpush1.msra.mxu0 0.0
    %214 = vmatprep.subr.mxu0 0.0
    %215 = vmatpush1.msra.mxu0 0.0
    %216 = vmatprep.subr.mxu0 0.0
    %217 = vmatpush1.msra.mxu0 0.0
    %218 = vmatprep.subr.mxu0 0.0
    %219 = vmatpush1.msra.mxu0 0.0
    %220 = vmatprep.subr.mxu0 0.0
    %221 = vmatpush1.msra.mxu0 0.0
    %222 = vmatprep.subr.mxu0 0.0
    %223 = vmatpush1.msra.mxu0 0.0
    %224 = vmatprep.subr.mxu0 0.0
    %225 = vmatpush1.msra.mxu0 0.0
    %226 = vmatprep.subr.mxu0 0.0
    %227 = vmatpush1.msra.mxu0 0.0
    %228 = vmatprep.subr.mxu0 0.0
    %229 = vmatpush1.msra.mxu0 0.0
    %230 = vmatprep.subr.mxu0 0.0
    %231 = vmatpush1.msra.mxu0 0.0
    %232 = vmatprep.subr.mxu0 0.0
    %233 = vmatpush1.msra.mxu0 0.0
    %234 = vmatprep.subr.mxu0 0.0
    %235 = vmatpush1.msra.mxu0 0.0
    %236 = vmatprep.subr.mxu0 0.0
    %237 = vmatpush1.msra.mxu0 0.0
    %238 = vmatprep.subr.mxu0 0.0
    %239 = vmatpush1.msra.mxu0 0.0
    %240 = vmatprep.subr.mxu0 0.0
    %241 = vmatpush1.msra.mxu0 0.0
    %242 = vmatprep.subr.mxu0 0.0
    %243 = vmatpush1.msra.mxu0 0.0
    %244 = vmatprep.subr.mxu0 0.0
    %245 = vmatpush1.msra.mxu0 0.0
    %246 = vmatprep.subr.mxu0 0.0
    %247 = vmatpush1.msra.mxu0 0.0
    %248 = vmatprep.mubr.f32.mxu0 0.0
    %249 = vmatmul.mubr.f32.gmra.mrb[0].mxu0 %v137
    %v250 = vpop.f32.mrb[0].mxu0
    %v251 = vadd.f32 0.0, %v250
    %v252 = vpop.f32.mrb[0].mxu0
    %v253 = vadd.f32 0.0, %v252
    %254 = vmatprep.mubr.f32.mxu0 0.0
    %255 = vmatmul.mubr.f32.gmra.mrb[0].mxu0 %v140
    %v256 = vpop.f32.mrb[0].mxu0
    %v257 = vadd.f32 0.0, %v256
    %v258 = vpop.f32.mrb[0].mxu0
    %v259 = vadd.f32 0.0, %v258
    %260 = vmatprep.mubr.f32.mxu0 0.0
    %261 = vmatmul.mubr.f32.gmra.mrb[0].mxu0 %v143
    %v262 = vpop.f32.mrb[0].mxu0
    %v263 = vadd.f32 0.0, %v262
    %v264 = vpop.f32.mrb[0].mxu0
    %v265 = vadd.f32 0.0, %v264
    %266 = vmatprep.mubr.f32.mxu0 0.0
    %267 = vmatmul.mubr.f32.gmra.mrb[0].mxu0 %v146
    %v268 = vpop.f32.mrb[0].mxu0
    %v269 = vadd.f32 0.0, %v268
    %v270 = vpop.f32.mrb[0].mxu0
    %v271 = vadd.f32 0.0, %v270
    %272 = vmatprep.mubr.f32.mxu0 0.0
    %273 = vmatmul.mubr.f32.gmra.mrb[0].mxu0 %v149
    %v274 = vpop.f32.mrb[0].mxu0
    %v275 = vadd.f32 0.0, %v274
    %v276 = vpop.f32.mrb[0].mxu0
    %v277 = vadd.f32 0.0, %v276
    %278 = vmatprep.mubr.f32.mxu0 0.0
    %279 = vmatmul.mubr.f32.gmra.mrb[0].mxu0 %v152
    %v280 = vpop.f32.mrb[0].mxu0
    %v281 = vadd.f32 0.0, %v280
    %v282 = vpop.f32.mrb[0].mxu0
    %v283 = vadd.f32 0.0, %v282
    %284 = vmatprep.mubr.f32.mxu0 0.0
    %285 = vmatmul.mubr.f32.gmra.mrb[0].mxu0 %v155
    %v286 = vpop.f32.mrb[0].mxu0
    %v287 = vadd.f32 0.0, %v286
    %v288 = vpop.f32.mrb[0].mxu0
    %v289 = vadd.f32 0.0, %v288
    %290 = vmatprep.mubr.f32.mxu0 0.0
    %291 = vmatmul.mubr.f32.gmra.mrb[0].mxu0 %v158
    %v292 = vpop.f32.mrb[0].mxu0
    %v293 = vadd.f32 0.0, %v292
    %v294 = vpop.f32.mrb[0].mxu0
    %v295 = vadd.f32 0.0, %v294
    %296 = vmatprep.mubr.f32.mxu0 0.0
    %297 = vmatmul.mubr.f32.gmra.mrb[0].mxu0 %v161
    %v298 = vpop.f32.mrb[0].mxu0
    %v299 = vadd.f32 0.0, %v298
    %v300 = vpop.f32.mrb[0].mxu0
    %v301 = vadd.f32 0.0, %v300
    %302 = vmatprep.mubr.f32.mxu0 0.0
    %303 = vmatmul.mubr.f32.gmra.mrb[0].mxu0 %v164
    %v304 = vpop.f32.mrb[0].mxu0
    %v305 = vadd.f32 0.0, %v304
    %v306 = vpop.f32.mrb[0].mxu0
    %v307 = vadd.f32 0.0, %v306
    %308 = vmatprep.mubr.f32.mxu0 0.0
    %309 = vmatmul.mubr.f32.gmra.mrb[0].mxu0 %v167
    %v310 = vpop.f32.mrb[0].mxu0
    %v311 = vadd.f32 0.0, %v310
    %v312 = vpop.f32.mrb[0].mxu0
    %v313 = vadd.f32 0.0, %v312
    %314 = vmatprep.mubr.f32.mxu0 0.0
    %315 = vmatmul.mubr.f32.gmra.mrb[0].mxu0 %v170
    %v316 = vpop.f32.mrb[0].mxu0
    %v317 = vadd.f32 0.0, %v316
    %v318 = vpop.f32.mrb[0].mxu0
    %v319 = vadd.f32 0.0, %v318
    %320 = vmatprep.mubr.f32.mxu0 0.0
    %321 = vmatmul.mubr.f32.gmra.mrb[0].mxu0 %v173
    %v322 = vpop.f32.mrb[0].mxu0
    %v323 = vadd.f32 0.0, %v322
    %v324 = vpop.f32.mrb[0].mxu0
    %v325 = vadd.f32 0.0, %v324
    %326 = vmatprep.mubr.f32.mxu0 0.0
    %327 = vmatmul.mubr.f32.gmra.mrb[0].mxu0 %v176
    %v328 = vpop.f32.mrb[0].mxu0
    %v329 = vadd.f32 0.0, %v328
    %v330 = vpop.f32.mrb[0].mxu0
    %v331 = vadd.f32 0.0, %v330
    %332 = vmatprep.mubr.f32.mxu0 0.0
    %333 = vmatmul.mubr.f32.gmra.mrb[0].mxu0 %v179
    %v334 = vpop.f32.mrb[0].mxu0
    %v335 = vadd.f32 0.0, %v334
    %v336 = vpop.f32.mrb[0].mxu0
    %v337 = vadd.f32 0.0, %v336
    %338 = vmatprep.mubr.f32.mxu0 0.0
    %339 = vmatmul.mubr.f32.gmra.mrb[0].mxu0 %v182
    %v340 = vpop.f32.mrb[0].mxu0
    %v341 = vadd.f32 0.0, %v340
    %v342 = vpop.f32.mrb[0].mxu0
    %v343 = vadd.f32 0.0, %v342
    %344 = vdwg.mxu0
    %v345 = vtanh.pop %v251
    %v346 = vtanh.pop %v253
    %v347 = vtanh.pop %v257
    %v348 = vtanh.pop %v259
    %v349 = vtanh.pop %v263
    %v350 = vtanh.pop %v265
    %v351 = vtanh.pop %v269
    %v352 = vtanh.pop %v271
    %v353 = vtanh.pop %v275
    %v354 = vtanh.pop %v277
    %v355 = vtanh.pop %v281
    %v356 = vtanh.pop %v283
    %v357 = vtanh.pop %v287
    %v358 = vtanh.pop %v289
    %v359 = vtanh.pop %v293
    %v360 = vtanh.pop %v295
    %v361 = vtanh.pop %v299
    %v362 = vtanh.pop %v301
    %v363 = vtanh.pop %v305
    %v364 = vtanh.pop %v307
    %v365 = vtanh.pop %v311
    %v366 = vtanh.pop %v313
    %v367 = vtanh.pop %v317
    %v368 = vtanh.pop %v319
    %v369 = vtanh.pop %v323
    %v370 = vtanh.pop %v325
    %v371 = vtanh.pop %v329
    %v372 = vtanh.pop %v331
    %v373 = vtanh.pop %v335
    %v374 = vtanh.pop %v337
    %v375 = vtanh.pop %v341
    %v376 = vtanh.pop %v343
    %v377 = vsub.f32 0.0, %v44
    %v378 = vlaneseq
    %v379 = vshrl.u32 %v378, 7
    %v380 = vsub.s32 0, %v379
    %v381 = vrot.slane %v132, %v380
    %v382 = vlaneseq
    %v383 = vshrl.u32 %v382, 7
    %v384 = vsub.s32 0, %v383
    %v385 = vrot.slane %v377, %v384
    %v386 = vmul.f32 %v345, %v381
    %v387 = vmul.f32 %v346, %v385
    %v388 = vmul.f32 %v347, %v381
    %v389 = vmul.f32 %v348, %v385
    %v390 = vmul.f32 %v349, %v381
    %v391 = vmul.f32 %v350, %v385
    %v392 = vmul.f32 %v351, %v381
    %v393 = vmul.f32 %v352, %v385
    %v394 = vmul.f32 %v353, %v381
    %v395 = vmul.f32 %v354, %v385
    %v396 = vmul.f32 %v355, %v381
    %v397 = vmul.f32 %v356, %v385
    %v398 = vmul.f32 %v357, %v381
    %v399 = vmul.f32 %v358, %v385
    %v400 = vmul.f32 %v359, %v381
    %v401 = vmul.f32 %v360, %v385
    %v402 = vmul.f32 %v361, %v381
    %v403 = vmul.f32 %v362, %v385
    %v404 = vmul.f32 %v363, %v381
    %v405 = vmul.f32 %v364, %v385
    %v406 = vmul.f32 %v365, %v381
    %v407 = vmul.f32 %v366, %v385
    %v408 = vmul.f32 %v367, %v381
    %v409 = vmul.f32 %v368, %v385
    %v410 = vmul.f32 %v369, %v381
    %v411 = vmul.f32 %v370, %v385
    %v412 = vmul.f32 %v371, %v381
    %v413 = vmul.f32 %v372, %v385
    %v414 = vmul.f32 %v373, %v381
    %v415 = vmul.f32 %v374, %v385
    %v416 = vmul.f32 %v375, %v381
    %v417 = vmul.f32 %v376, %v385
    %v418 = vadd.f32 %v386, %v387
    %419 = vadd.xlane.f32.xlu0 %v418
    %v420 = vpop.xlane.xlu0 %419
    %v421 = vadd.f32 %v388, %v389
    %422 = vadd.xlane.f32.xlu0 %v421
    %v423 = vpop.xlane.xlu0 %422
    %v424 = vadd.f32 %v390, %v391
    %425 = vadd.xlane.f32.xlu0 %v424
    %v426 = vpop.xlane.xlu0 %425
    %v427 = vadd.f32 %v392, %v393
    %428 = vadd.xlane.f32.xlu0 %v427
    %v429 = vpop.xlane.xlu0 %428
    %v430 = vadd.f32 %v394, %v395
    %431 = vadd.xlane.f32.xlu0 %v430
    %v432 = vpop.xlane.xlu0 %431
    %v433 = vadd.f32 %v396, %v397
    %434 = vadd.xlane.f32.xlu0 %v433
    %v435 = vpop.xlane.xlu0 %434
    %v436 = vadd.f32 %v398, %v399
    %437 = vadd.xlane.f32.xlu0 %v436
    %v438 = vpop.xlane.xlu0 %437
    %v439 = vadd.f32 %v400, %v401
    %440 = vadd.xlane.f32.xlu0 %v439
    %v441 = vpop.xlane.xlu0 %440
    %v442 = vadd.f32 %v402, %v403
    %443 = vadd.xlane.f32.xlu0 %v442
    %v444 = vpop.xlane.xlu0 %443
    %v445 = vadd.f32 %v404, %v405
    %446 = vadd.xlane.f32.xlu0 %v445
    %v447 = vpop.xlane.xlu0 %446
    %v448 = vadd.f32 %v406, %v407
    %449 = vadd.xlane.f32.xlu0 %v448
    %v450 = vpop.xlane.xlu0 %449
    %v451 = vadd.f32 %v408, %v409
    %452 = vadd.xlane.f32.xlu0 %v451
    %v453 = vpop.xlane.xlu0 %452
    %v454 = vadd.f32 %v410, %v411
    %455 = vadd.xlane.f32.xlu0 %v454
    %v456 = vpop.xlane.xlu0 %455
    %v457 = vadd.f32 %v412, %v413
    %458 = vadd.xlane.f32.xlu0 %v457
    %v459 = vpop.xlane.xlu0 %458
    %v460 = vadd.f32 %v414, %v415
    %461 = vadd.xlane.f32.xlu0 %v460
    %v462 = vpop.xlane.xlu0 %461
    %v463 = vadd.f32 %v416, %v417
    %464 = vadd.xlane.f32.xlu0 %v463
    %v465 = vpop.xlane.xlu0 %464
    %v466 = vmul.f32 %v420, %v420
    %v467 = vmul.f32 %v423, %v423
    %v468 = vmul.f32 %v426, %v426
    %v469 = vmul.f32 %v429, %v429
    %v470 = vmul.f32 %v432, %v432
    %v471 = vmul.f32 %v435, %v435
    %v472 = vmul.f32 %v438, %v438
    %v473 = vmul.f32 %v441, %v441
    %v474 = vmul.f32 %v444, %v444
    %v475 = vmul.f32 %v447, %v447
    %v476 = vmul.f32 %v450, %v450
    %v477 = vmul.f32 %v453, %v453
    %v478 = vmul.f32 %v456, %v456
    %v479 = vmul.f32 %v459, %v459
    %v480 = vmul.f32 %v462, %v462
    %v481 = vmul.f32 %v465, %v465
    %v482 = vadd.f32 %v466, %v467
    %v483 = vadd.f32 %v482, %v468
    %v484 = vadd.f32 %v483, %v469
    %v485 = vadd.f32 %v484, %v470
    %v486 = vadd.f32 %v485, %v471
    %v487 = vadd.f32 %v486, %v472
    %v488 = vadd.f32 %v487, %v473
    %v489 = vadd.f32 %v488, %v474
    %v490 = vadd.f32 %v489, %v475
    %v491 = vadd.f32 %v490, %v476
    %v492 = vadd.f32 %v491, %v477
    %v493 = vadd.f32 %v492, %v478
    %v494 = vadd.f32 %v493, %v479
    %v495 = vadd.f32 %v494, %v480
    %v496 = vadd.f32 %v495, %v481
    %v497 = vrot.slane %v496, 4
    %v498 = vadd.f32 %v496, %v497
    %v499 = vrot.slane %v498, 2
    %v500 = vadd.f32 %v498, %v499
    %v501 = vrot.slane %v500, 1
    %v502 = vadd.f32 %v500, %v501
    %v503 = vrcp.pop 128.0
    %v504 = vmul.f32 %v502, %v503
    %v505 = vmul.f32 %v132, %v132
    %vm506 = vcmask 1040384
    %v507 = vsel %vm506, %v505, 0.0
    %508 = vadd.xlane.f32.xlu0 %v507
    %v509 = vpop.xlane.xlu0 %508
    %s510 = sld [smem:[#allocation2]]
    %v511 = vstv %s510
    %v512 = vmul.f32 %v511, %v509
    %v513 = vadd.f32 %v504, %v512
    %vm514 = vcmask 0
    %515 = vst.msk [vmem:[#allocation3] sm:$0x1] %vm514, %v513
    %516 = vst [vmem:[#allocation5] sm:$0x1] %v132
    // Predicated region
    $region26: #{tpu_custom_call.1} parent=1 // pred_check
      _
    $region27: #{tpu_custom_call.1} parent=1 // pred_check_branch
      %518 = sbr.rel (0) target = $region29
    $region28: #{tpu_custom_call.1} parent=1 // pred_region
      %s520 = ssub.s32 16, 16
      %521 = vsyncadd [#allocation4], %s520
      %s523 = sshll.u32 [#allocation3], 4
      %s524 = int_to_ptr.vmem [resolvable:$true] %s523
      %526 = dma.vmem_to_hbm [thread:$0]  %s524, 16, %s6, [#allocation4]
    $region29: #{tpu_custom_call.1} parent=1 // pred_fallthru
      _
    // Predicated region
    $region30: #{tpu_custom_call.1} parent=1 // pred_check
      _
    $region31: #{tpu_custom_call.1} parent=1 // pred_check_branch
      %528 = sbr.rel (0) target = $region33
    $region32: #{tpu_custom_call.1} parent=1 // pred_region
      %s530 = ssub.s32 16, 16
      %531 = vsyncadd [#allocation6], %s530
      %s533 = sshll.u32 [#allocation5], 4
      %s534 = int_to_ptr.vmem [resolvable:$true] %s533
      %536 = dma.vmem_to_hbm [thread:$0]  %s534, 16, %s7, [#allocation6]
    $region33: #{tpu_custom_call.1} parent=1 // pred_fallthru
      _
    // Predicated region
    $region34: #{tpu_custom_call.1} parent=1 // pred_check
      _
    $region35: #{tpu_custom_call.1} parent=1 // pred_check_branch
      %538 = sbr.rel (0) target = $region37
    $region36: #{tpu_custom_call.1} parent=1 // pred_region
      %539 = dma.done [#allocation4], 16
    $region37: #{tpu_custom_call.1} parent=1 // pred_fallthru
      _
    // Predicated region
    $region38: #{tpu_custom_call.1} parent=1 // pred_check
      _
    $region39: #{tpu_custom_call.1} parent=1 // pred_check_branch
      %541 = sbr.rel (0) target = $region41
    $region40: #{tpu_custom_call.1} parent=1 // pred_region
      %542 = dma.done [#allocation6], 16
    $region41: #{tpu_custom_call.1} parent=1 // pred_fallthru
      _
    %543 = vsyncpa [#allocation4], 1
    %544 = vsyncpa [#allocation6], 1

</llo_original>
